<compile_context>
chip_gen: v6e
topology: v6e:2x2x1
jax: 0.10.0
libtpu: 0.0.40
codegen_flags: <defaults>
</compile_context>

<pallas_src>
import jax
import jax.numpy as jnp
from jax.experimental import pallas as pl
from jax.experimental.pallas import tpu as pltpu


def _self_attention_kernel(h_ref, w_ref, ctx_ref, alpha_ref):
    # h_ref:     (BB, T, D)  block of hidden states
    # w_ref:     (1, D)      attention projection weight (lane-dense)
    # ctx_ref:   (BB, D)     tanh-pooled context vectors (lane-dense)
    # alpha_ref: (BB, T)     attention weights (lane-dense)
    h = h_ref[...].astype(jnp.float32)   # upcast once right after load (bf16-safe on v5e)
    w = w_ref[...].astype(jnp.float32)   # (1, D)

    # scores[b, t] = sum_d h[b, t, d] * w[d]   (VPU mul + lane reduce; no MXU, no N=1 matmul)
    scores = jnp.sum(h * w[None, :, :], axis=-1)            # (BB, T)

    # softmax over the sequence axis T
    m = jnp.max(scores, axis=-1, keepdims=True)             # (BB, 1)
    e = jnp.exp(scores - m)                                  # (BB, T)  (EUP)
    denom = jnp.sum(e, axis=-1, keepdims=True)               # (BB, 1)
    alpha = e * pl.reciprocal(denom, approx=True)            # (BB, T)  (EUP reciprocal)
    alpha_ref[...] = alpha.astype(alpha_ref.dtype)

    # ctx[b, d] = sum_t h[b, t, d] * alpha[b, t]
    # (VPU mul + sublane reduce; replaces the h.T XLU transpose + N=1 matmul)
    ctx = jnp.sum(h * alpha[:, :, None], axis=1)             # (BB, D)
    ctx_ref[...] = jnp.tanh(ctx).astype(ctx_ref.dtype)


def _choose_block_b(B, T, D, itemsize, target_block_bytes=4 << 20):
    """Batch rows per grid step: aim for ~4 MiB input tiles (double-buffering safe on
    v5e/v6e/v7x); keep the block sublane-aligned when it does not cover all of B."""
    rows = int(target_block_bytes // max(1, T * D * itemsize))
    if rows >= B:
        return B
    rows = max(8, (rows // 8) * 8)
    return min(rows, B)


def self_attention_v1(h, w, *, block_b=None, vmem_limit_bytes=48 << 20):
    """h: (B, T, D); w: (1, D) (nn.Linear(D,1).weight layout) or (D, 1).

    Returns (ctx, alpha) with torch-compatible shapes ((B, D, 1), (B, T, 1)).
    """
    B, T, D = h.shape
    if w.shape == (D, 1):
        w = w.T
    w = w.reshape(1, D)

    if block_b is None:
        block_b = _choose_block_b(B, T, D, jnp.dtype(h.dtype).itemsize)
    grid = (pl.cdiv(B, block_b),)

    grid_spec = pltpu.PrefetchScalarGridSpec(
        num_scalar_prefetch=0,
        grid=grid,
        in_specs=[
            pl.BlockSpec((block_b, T, D), lambda b: (b, 0, 0)),
            pl.BlockSpec((1, D), lambda b: (0, 0)),
        ],
        out_specs=[
            pl.BlockSpec((block_b, D), lambda b: (b, 0)),
            pl.BlockSpec((block_b, T), lambda b: (b, 0)),
        ],
    )
    ctx, alpha = pl.pallas_call(
        _self_attention_kernel,
        out_shape=(
            jax.ShapeDtypeStruct((B, D), h.dtype),
            jax.ShapeDtypeStruct((B, T), h.dtype),
        ),
        grid_spec=grid_spec,
        compiler_params=pltpu.CompilerParams(
            dimension_semantics=("parallel",),   # megacore-shardable batch axis (v7x)
            vmem_limit_bytes=vmem_limit_bytes,
        ),
    )(h, w)
    # Torch returns trailing singleton dims; add them wrapper-side so the kernel
    # stores stay lane-dense (pure layout plumbing, no compute).
    return ctx[..., None], alpha[..., None]


def _reference(h, w):
    # w: (1, D) lane-dense (torch nn.Linear(D, 1).weight layout)
    scores = jnp.einsum("btd,od->bt", h, w)                  # (B, T)
    alpha = jax.nn.softmax(scores, axis=1)[..., None]         # (B, T, 1)
    ctx = jnp.einsum("btd,bto->bdo", h, alpha)                # (B, D, 1)
    return jnp.tanh(ctx), alpha


if __name__ == "__main__":
    B, T, D = 2, 8, 32   # batch, seq, hidden (input_size = D)

    key = jax.random.PRNGKey(0)
    kh, kw = jax.random.split(key)
    h = jax.random.normal(kh, (B, T, D), dtype=jnp.float32)
    # deterministic init of nn.Linear(D, 1, bias=False).weight, shape (1, D)
    w = (jax.random.uniform(kw, (1, D), dtype=jnp.float32) - 0.5) * 2.0 / jnp.sqrt(D)

    x, alpha = self_attention_v1(h, w)
    jax.block_until_ready((x, alpha))

    x_ref, alpha_ref = _reference(h, w)
    assert x.shape == (B, D, 1) and alpha.shape == (B, T, 1)
    # tolerance loosened from 1e-5 to cover pl.reciprocal(approx=True)
    assert jnp.allclose(alpha, alpha_ref, atol=2e-3), "alpha mismatch"
    assert jnp.allclose(x, x_ref, atol=2e-3), "context mismatch"

    print("KERNEL_OK")
</pallas_src>

<mosaic_0001>
module attributes {stable_mosaic.version = 11 : i64} {
  func.func @_self_attention_kernel(%arg0: i32, %arg1: memref<2x8x32xf32, #tpu.memory_space<vmem>>, %arg2: memref<1x32xf32, #tpu.memory_space<vmem>>, %arg3: memref<2x32xf32, #tpu.memory_space<vmem>>, %arg4: memref<2x8xf32, #tpu.memory_space<vmem>>) attributes {dimension_semantics = [#tpu.dimension_semantics<parallel>], iteration_bounds = array<i64: 1>, scalar_prefetch = 0 : i64, scratch_operands = 0 : i64, tpu.core_type = #tpu.core_type<tc>, window_params = [{transform_indices = @transform_0, window_bounds = array<i64: 2, 8, 32>}, {pipeline_mode = #tpu.pipeline_mode<synchronous>, transform_indices = @transform_1, window_bounds = array<i64: 1, 32>}, {transform_indices = @transform_2, window_bounds = array<i64: 2, 32>}, {transform_indices = @transform_3, window_bounds = array<i64: 2, 8>}]} {
    %c0 = arith.constant 0 : index
    %c0_0 = arith.constant 0 : index
    %c0_1 = arith.constant 0 : index
    %0 = vector.load %arg1[%c0, %c0_0, %c0_1] : memref<2x8x32xf32, #tpu.memory_space<vmem>>, vector<2x8x32xf32>
    %c0_2 = arith.constant 0 : index
    %c0_3 = arith.constant 0 : index
    %1 = vector.load %arg2[%c0_2, %c0_3] : memref<1x32xf32, #tpu.memory_space<vmem>>, vector<1x32xf32>
    %2 = vector.shape_cast %1 : vector<1x32xf32> to vector<1x1x32xf32>
    %3 = vector.broadcast %2 : vector<1x1x32xf32> to vector<2x8x32xf32>
    %4 = arith.mulf %0, %3 : vector<2x8x32xf32>
    %cst = arith.constant dense<0.000000e+00> : vector<2x8xf32>
    %5 = vector.multi_reduction <add>, %4, %cst [2] : vector<2x8x32xf32> to vector<2x8xf32>
    %cst_4 = arith.constant dense<0xFF800000> : vector<2xf32>
    %6 = vector.multi_reduction <maximumf>, %5, %cst_4 [1] : vector<2x8xf32> to vector<2xf32>
    %7 = vector.shape_cast %6 : vector<2xf32> to vector<2x1xf32>
    %8 = vector.broadcast %7 : vector<2x1xf32> to vector<2x8xf32>
    %9 = arith.subf %5, %8 : vector<2x8xf32>
    %10 = math.exp %9 : vector<2x8xf32>
    %cst_5 = arith.constant dense<0.000000e+00> : vector<2xf32>
    %11 = vector.multi_reduction <add>, %10, %cst_5 [1] : vector<2x8xf32> to vector<2xf32>
    %12 = vector.shape_cast %11 : vector<2xf32> to vector<2x1xf32>
    %13 = tpu.reciprocal %12 {approx = true} : vector<2x1xf32> -> vector<2x1xf32>
    %14 = vector.broadcast %13 : vector<2x1xf32> to vector<2x8xf32>
    %15 = arith.mulf %10, %14 : vector<2x8xf32>
    %c0_6 = arith.constant 0 : index
    %c0_7 = arith.constant 0 : index
    %16 = vector.load %arg4[%c0_6, %c0_7] : memref<2x8xf32, #tpu.memory_space<vmem>>, vector<2x8xf32>
    tpu.vector_store %arg4[%c0_6, %c0_7], %15 {strides = array<i32>} : memref<2x8xf32, #tpu.memory_space<vmem>>, vector<2x8xf32>,
    %17 = vector.shape_cast %15 : vector<2x8xf32> to vector<2x8x1xf32>
    %18 = vector.broadcast %17 : vector<2x8x1xf32> to vector<2x8x32xf32>
    %19 = arith.mulf %0, %18 : vector<2x8x32xf32>
    %cst_8 = arith.constant dense<0.000000e+00> : vector<2x32xf32>
    %20 = vector.multi_reduction <add>, %19, %cst_8 [1] : vector<2x8x32xf32> to vector<2x32xf32>
    %21 = math.tanh %20 : vector<2x32xf32>
    %c0_9 = arith.constant 0 : index
    %c0_10 = arith.constant 0 : index
    %22 = vector.load %arg3[%c0_9, %c0_10] : memref<2x32xf32, #tpu.memory_space<vmem>>, vector<2x32xf32>
    tpu.vector_store %arg3[%c0_9, %c0_10], %21 {strides = array<i32>} : memref<2x32xf32, #tpu.memory_space<vmem>>, vector<2x32xf32>,
    return
  }
  func.func @transform_0(%arg0: i32) -> (i32, i32, i32) {
    %c0_i32 = arith.constant 0 : i32
    %c0_i32_0 = arith.constant 0 : i32
    %c0_i32_1 = arith.constant 0 : i32
    return %arg0, %c0_i32, %c0_i32_0 : i32, i32, i32
  }
  func.func @transform_1(%arg0: i32) -> (i32, i32) {
    %c0_i32 = arith.constant 0 : i32
    %c0_i32_0 = arith.constant 0 : i32
    %c0_i32_1 = arith.constant 0 : i32
    return %c0_i32, %c0_i32_0 : i32, i32
  }
  func.func @transform_2(%arg0: i32) -> (i32, i32) {
    %c0_i32 = arith.constant 0 : i32
    %c0_i32_0 = arith.constant 0 : i32
    return %arg0, %c0_i32 : i32, i32
  }
  func.func @transform_3(%arg0: i32) -> (i32, i32) {
    %c0_i32 = arith.constant 0 : i32
    %c0_i32_0 = arith.constant 0 : i32
    return %arg0, %c0_i32 : i32, i32
  }
}

</mosaic_0001>

<llo_original>
// kernel: tpu_custom_call.1
$region0: #{tpu_custom_call.1}
  #allocation0 [shape = 'u32[]', space=smem, size = 0x4, offset = 0x4, fixed_abs, tag = 'smem constant byte address 0x4 - core index']
  #allocation1 [shape = 'u32[144,128]{1,0:T(1,128)}', space=vmem, size = 0x12000, scoped, tag = 'internal scratch']
  %s0 = inlined_call_operand.hbm [shape: f32[2,8,32], index: 0, kind: input, shape index: {}]
  %s1 = inlined_call_operand.vmem [shape: f32[1,32], index: 1, kind: input, shape index: {}]
  %s2 = inlined_call_operand.hbm [shape: f32[2,32], index: 2, kind: output, shape index: {0}]
  %s3 = inlined_call_operand.hbm [shape: f32[2,8], index: 3, kind: output, shape index: {1}]
  %4 = xla_tuple %s2, %s3
  %s5 = sld [smem:[#allocation0]]
  $region30: #{tpu_custom_call.1} parent=0
    _
  %s7 = ssub.s32 1, %s5
  %s8 = scalar_select 0, %s7, %s5
  $region1: #{tpu_custom_call.1} parent=0
    #allocation2 [shape = 'u8[8192]{0}', space=vmem, size = 0x2000, scoped, tag = 'input window, operand 0, single buffered']
    #allocation3 [shape = 's32[1]{0}', space=sflag, size = 0x4, scoped, tag = 'scoped memory for tpu_custom_call.1']
    #allocation4 [shape = 's32[1]{0}', space=sflag, size = 0x4, scoped, tag = 'scoped memory for tpu_custom_call.1']
    #allocation5 [shape = 'u8[1024]{0}', space=vmem, size = 0x400, scoped, tag = 'output window, operand 0, single buffered']
    #allocation6 [shape = 'u8[1024]{0}', space=vmem, size = 0x400, scoped, tag = 'output window, operand 1, single buffered']
    #allocation7 [shape = 's32[1]{0}', space=sflag, size = 0x4, scoped, tag = 'scoped memory for tpu_custom_call.1']
    %9 = vsyncpa [#allocation3], 0
    %10 = vsyncpa [#allocation4], 0
    %11 = vsyncpa [#allocation7], 0
    // Predicated region
    $region2: #{tpu_custom_call.1} parent=1 // pred_check
      _
    $region3: #{tpu_custom_call.1} parent=1 // pred_check_branch
      %13 = sbr.rel (0) target = $region5
    $region4: #{tpu_custom_call.1} parent=1 // pred_region
      %s15 = ssub.s32 256, 256
      %16 = vsyncadd [#allocation3], %s15
      %s17 = sshll.u32 [#allocation2], 4
      %s18 = int_to_ptr.vmem [resolvable:$true] %s17
      %23 = dma.hbm_to_vmem [thread:$0]  %s0, 256, %s18, [#allocation3], 128, 128, 8
    $region5: #{tpu_custom_call.1} parent=1 // pred_fallthru
      _
    // Predicated region
    $region6: #{tpu_custom_call.1} parent=1 // pred_check
      _
    $region7: #{tpu_custom_call.1} parent=1 // pred_check_branch
      %25 = sbr.rel (0) target = $region9
    $region8: #{tpu_custom_call.1} parent=1 // pred_region
      _
    $region9: #{tpu_custom_call.1} parent=1 // pred_fallthru
      _
    // Predicated region
    $region10: #{tpu_custom_call.1} parent=1 // pred_check
      _
    $region11: #{tpu_custom_call.1} parent=1 // pred_check_branch
      %27 = sbr.rel (0) target = $region13
    $region12: #{tpu_custom_call.1} parent=1 // pred_region
      %28 = dma.done [#allocation3], 256
    $region13: #{tpu_custom_call.1} parent=1 // pred_fallthru
      _
    %v29 = vld [vmem:[#allocation2] sm:$0xff]
    %v30 = vld [vmem:[#allocation2 + $0x8] sm:$0xff]
    %v31 = vld [vmem:[%s1] sm:$0x1]
    %v33 = vlaneseq
    %v34 = vshrl.u32 %v33, 7
    %v35 = vsub.s32 0, %v34
    %v36 = vrot.slane %v31, %v35
    %v38 = vmul.f32 %v29, %v36
    %v39 = vmul.f32 %v30, %v36
    %vm40 = vcmask 261120
    %v41 = vsel %vm40, %v38, 0.0
    %42 = vadd.xlane.f32.xlu0 %v41
    %v43 = vpop.xlane.xlu0 %42
    %v44 = vsel %vm40, %v39, 0.0
    %45 = vadd.xlane.f32.xlu0 %v44
    %v46 = vpop.xlane.xlu0 %45
    %v49 = vlaneseq
    %v50 = vand.u32 %v49, 127
    %v51 = vlaneseq
    %v52 = vshrl.u32 %v51, 7
    %v53 = vsub.s32 %v50, %v52
    %v54 = vrot.slane %v43, %v53
    %v55 = vlaneseq
    %v56 = vshrl.u32 %v55, 7
    %v57 = vsub.s32 %v50, %v56
    %v58 = vrot.slane %v46, %v57
    %vm59 = vcmask 1041409
    %v60 = vsel %vm59, %v58, %v54
    %vm62 = vcmask 58368
    %v63 = vsel %vm62, %v60, -inf
    %64 = vmax.xlane.f32.xlu0 %v63
    %v65 = vpop.xlane.xlu0 %64
    %v67 = vlaneseq
    %v68 = vshrl.u32 %v67, 7
    %v69 = vsub.s32 0, %v68
    %v70 = vrot.slane %v65, %v69
    %v71 = vlaneseq
    %v72 = vshrl.u32 %v71, 7
    %v73 = vsub.s32 1, %v72
    %v74 = vrot.slane %v65, %v73
    %v77 = vsub.f32 %v43, %v70
    %v78 = vsub.f32 %v46, %v74
    %v79 = vmul.f32 %v77, 1.442695
    %v80 = vpow.pop %v79
    %v81 = vmul.f32 %v78, 1.442695
    %v82 = vpow.pop %v81
    %85 = vset.pattern.permute.xlu0 0
    %86 = vperm.xlu0 %85, %v80
    %v87 = vpop.permute.xlu0 %86
    %88 = vset.pattern.permute.xlu0 0
    %89 = vperm.xlu0 %88, %v82
    %v90 = vpop.permute.xlu0 %89
    %v91 = vlaneseq
    %v92 = vshrl.u32 %v91, 7
    %v93 = vsub.s32 %v50, %v92
    %v94 = vrot.slane %v87, %v93
    %v95 = vlaneseq
    %v96 = vshrl.u32 %v95, 7
    %v97 = vsub.s32 %v50, %v96
    %v98 = vrot.slane %v90, %v97
    %v99 = vsel %vm59, %v98, %v94
    %v101 = vsel %vm62, %v99, 0.0
    %102 = vadd.xlane.f32.xlu0 %v101
    %v103 = vpop.xlane.xlu0 %102
    %v104 = vrcp.pop %v103
    %v106 = vlaneseq
    %v107 = vshrl.u32 %v106, 7
    %v108 = vsub.s32 0, %v107
    %v109 = vrot.slane %v104, %v108
    %v110 = vlaneseq
    %v111 = vshrl.u32 %v110, 7
    %v112 = vsub.s32 1, %v111
    %v113 = vrot.slane %v104, %v112
    %v116 = vmul.f32 %v80, %v109
    %v117 = vmul.f32 %v82, %v113
    %120 = vset.pattern.permute.xlu0 0
    %121 = vperm.xlu0 %120, %v116
    %v122 = vpop.permute.xlu0 %121
    %123 = vset.pattern.permute.xlu0 0
    %124 = vperm.xlu0 %123, %v117
    %v125 = vpop.permute.xlu0 %124
    %v126 = vlaneseq
    %v127 = vshrl.u32 %v126, 7
    %v128 = vsub.s32 %v50, %v127
    %v129 = vrot.slane %v122, %v128
    %v130 = vlaneseq
    %v131 = vshrl.u32 %v130, 7
    %v132 = vsub.s32 %v50, %v131
    %v133 = vrot.slane %v125, %v132
    %v134 = vsel %vm59, %v133, %v129
    %136 = vst.msk [vmem:[#allocation6] sm:$0x3] %vm62, %v134
    %v139 = vmul.f32 %v29, %v122
    %v140 = vmul.f32 %v30, %v125
    %v141 = vsel %vm40, %v139, 0.0
    %v142 = vrot.slane %v141, 4
    %v143 = vadd.f32 %v141, %v142
    %v144 = vrot.slane %v143, 2
    %v145 = vadd.f32 %v143, %v144
    %v146 = vrot.slane %v145, 1
    %v147 = vadd.f32 %v145, %v146
    %v148 = vsel %vm40, %v140, 0.0
    %v149 = vrot.slane %v148, 4
    %v150 = vadd.f32 %v148, %v149
    %v151 = vrot.slane %v150, 2
    %v152 = vadd.f32 %v150, %v151
    %v153 = vrot.slane %v152, 1
    %v154 = vadd.f32 %v152, %v153
    %v155 = vtanh.pop %v147
    %v156 = vtanh.pop %v154
    %v159 = vsel %vm59, %v156, %v155
    %vm161 = vcmask 254976
    %162 = vst.msk [vmem:[#allocation5] sm:$0x3] %vm161, %v159
    // Predicated region
    $region14: #{tpu_custom_call.1} parent=1 // pred_check
      _
    $region15: #{tpu_custom_call.1} parent=1 // pred_check_branch
      %164 = sbr.rel (0) target = $region17
    $region16: #{tpu_custom_call.1} parent=1 // pred_region
      %s166 = ssub.s32 32, 32
      %167 = vsyncadd [#allocation4], %s166
      %s169 = sshll.u32 [#allocation5], 4
      %s170 = int_to_ptr.vmem [resolvable:$true] %s169
      %172 = dma.vmem_to_hbm [thread:$0]  %s170, 32, %s2, [#allocation4]
    $region17: #{tpu_custom_call.1} parent=1 // pred_fallthru
      _
    // Predicated region
    $region18: #{tpu_custom_call.1} parent=1 // pred_check
      _
    $region19: #{tpu_custom_call.1} parent=1 // pred_check_branch
      %174 = sbr.rel (0) target = $region21
    $region20: #{tpu_custom_call.1} parent=1 // pred_region
      %s176 = ssub.s32 32, 32
      %177 = vsyncadd [#allocation7], %s176
      %s179 = sshll.u32 [#allocation6], 4
      %s180 = int_to_ptr.vmem [resolvable:$true] %s179
      %182 = dma.vmem_to_hbm [thread:$0]  %s180, 32, %s3, [#allocation7]
    $region21: #{tpu_custom_call.1} parent=1 // pred_fallthru
      _
    // Predicated region
    $region22: #{tpu_custom_call.1} parent=1 // pred_check
      _
    $region23: #{tpu_custom_call.1} parent=1 // pred_check_branch
      %184 = sbr.rel (0) target = $region25
    $region24: #{tpu_custom_call.1} parent=1 // pred_region
      %185 = dma.done [#allocation4], 32
    $region25: #{tpu_custom_call.1} parent=1 // pred_fallthru
      _
    // Predicated region
    $region26: #{tpu_custom_call.1} parent=1 // pred_check
      _
    $region27: #{tpu_custom_call.1} parent=1 // pred_check_branch
      %187 = sbr.rel (0) target = $region29
    $region28: #{tpu_custom_call.1} parent=1 // pred_region
      %188 = dma.done [#allocation7], 32
    $region29: #{tpu_custom_call.1} parent=1 // pred_fallthru
      _
    %189 = vsyncpa [#allocation3], 1
    %190 = vsyncpa [#allocation4], 1
    %191 = vsyncpa [#allocation7], 1

</llo_original>
